<compile_context>
chip_gen: v6e
topology: v6e:2x2x1
jax: 0.10.0
libtpu: 0.0.40
codegen_flags: <defaults>
</compile_context>

<pallas_src>
import jax
import jax.numpy as jnp
from jax import lax
from jax.experimental import pallas as pl
from jax.experimental.pallas import tpu as pltpu

_SUB_ROWS = 256  # in-kernel sub-chunk; bounds live f32 intermediates


def _round_up(n, m):
    return ((n + m - 1) // m) * m


def _cdiv(a, b):
    return -(-a // b)


def _mlp_kernel(x_ref,
                w1_ref, b1_ref,
                w2_ref, b2_ref,
                w3_ref, b3_ref,
                w4_ref, b4_ref,
                w5_ref,
                b5_ref,
                o_ref):
    """One batch tile: x (TB, D_in) bf16 -> o (1, TB) f32 (lane-dense row)."""
    tb = x_ref.shape[0]
    b5 = b5_ref[0, 0]

    # Static sub-chunk loop: each chunk's (r, 256)/(r, 128) f32 intermediates
    # die at its output store, keeping register pressure / VMEM spill traffic
    # bounded instead of materializing the full (TB, 256) activation.
    for s in range(0, tb, _SUB_ROWS):
        r = min(_SUB_ROWS, tb - s)
        xs = x_ref[s:s + r, :]

        # fc1 + ReLU   (r, D_in) @ (D_in, 128)   bf16 in / f32 acc
        h = jnp.dot(xs, w1_ref[...], preferred_element_type=jnp.float32)
        h = jnp.maximum(h + b1_ref[...], 0.0)
        # dropout -> identity (eval mode)

        # fc2 + ReLU   (r, 128) @ (128, 256)
        h = jnp.dot(h.astype(jnp.bfloat16), w2_ref[...],
                    preferred_element_type=jnp.float32)
        h = jnp.maximum(h + b2_ref[...], 0.0)

        # fc3 + ReLU   (r, 256) @ (256, 128)
        h = jnp.dot(h.astype(jnp.bfloat16), w3_ref[...],
                    preferred_element_type=jnp.float32)
        h = jnp.maximum(h + b3_ref[...], 0.0)

        # fc4 + ReLU   (r, 128) @ (128, 64)   (no 64->128 lane padding)
        h = jnp.dot(h.astype(jnp.bfloat16), w4_ref[...],
                    preferred_element_type=jnp.float32)
        h = jnp.maximum(h + b4_ref[...], 0.0)

        # fc5 (no activation): (1, 64) contracted with (r, 64) on the last
        # axis -> (1, r) row directly (lane-dense, no relayout/transpose).
        y = lax.dot_general(
            w5_ref[...], h.astype(jnp.bfloat16),
            dimension_numbers=(((1,), (1,)), ((), ())),
            preferred_element_type=jnp.float32) + b5

        o_ref[:, s:s + r] = y.astype(o_ref.dtype)


def prepare_params(params):
    """One-time cast of parameters into kernel layout.

    Returns (vmem_params, b5):
      vmem_params = (w1, b1, w2, b2, w3, b3, w4, b4, w5)
        w1..w4: bf16 (in, out); w5: bf16 (1, 64) row.
        b1..b4: f32 (1, out).
      b5: f32 (1, 1) scalar (placed in SMEM).
    """
    w1 = params["w1"].astype(jnp.bfloat16)
    w2 = params["w2"].astype(jnp.bfloat16)
    w3 = params["w3"].astype(jnp.bfloat16)
    w4 = params["w4"].astype(jnp.bfloat16)
    w5 = params["w5"].reshape(1, 64).astype(jnp.bfloat16)
    b1, b2, b3, b4 = params["b1"], params["b2"], params["b3"], params["b4"]
    b5 = params["b5"].reshape(1, 1).astype(jnp.float32)
    return (w1, b1, w2, b2, w3, b3, w4, b4, w5), b5


def _choose_tiling(B, block_rows):
    """Balanced batch tiles: multiple of 16 rows, >= 2 tiles for v7x megacore."""
    n_tiles = max(1, _cdiv(B, block_rows))
    if n_tiles == 1 and B >= 32:
        n_tiles = 2  # split across both TensorCores on v7x; harmless elsewhere
    tb = _round_up(_cdiv(B, n_tiles), 16)
    return tb, n_tiles


def io_neural_network(x, params, *, block_rows=2048):
    """Fused forward pass of IONeuralNetwork.

    x: (B, D_in) float32
    params: dict with w1..w5 stored (in_features, out_features) and
            b1..b5 stored (1, out_features), all float32.
    returns: (B, 1) float32
    """
    B, D_in = x.shape
    TB, n_tiles = _choose_tiling(B, block_rows)
    B_pad = TB * n_tiles
    if B_pad != B:
        x = jnp.pad(x, ((0, B_pad - B), (0, 0)))
    x_bf16 = x.astype(jnp.bfloat16)

    vmem_params, b5 = prepare_params(params)

    def x_map(i):
        return (i, 0)

    def resident_map(i):
        # Same block every grid step -> stays VMEM-resident (no re-DMA).
        return (0, 0)

    in_specs = [pl.BlockSpec((TB, D_in), x_map)]                       # x tile
    in_specs += [pl.BlockSpec(p.shape, resident_map) for p in vmem_params]
    in_specs += [pl.BlockSpec(memory_space=pltpu.MemorySpace.SMEM)]    # b5
    out_spec = pl.BlockSpec((1, TB), lambda i: (i, 0))                 # lane-dense row

    flops = 2 * B_pad * (D_in * 128 + 128 * 256 + 256 * 128 + 128 * 64 + 64)
    bytes_accessed = (x_bf16.size * x_bf16.dtype.itemsize
                      + B_pad * 4
                      + sum(p.size * p.dtype.itemsize for p in vmem_params)
                      + b5.size * b5.dtype.itemsize)
    cost = pl.CostEstimate(flops=flops, transcendentals=0,
                           bytes_accessed=bytes_accessed)

    out = pl.pallas_call(
        _mlp_kernel,
        out_shape=jax.ShapeDtypeStruct((n_tiles, TB), jnp.float32),
        grid=(n_tiles,),
        in_specs=in_specs,
        out_specs=out_spec,
        compiler_params=pltpu.CompilerParams(
            dimension_semantics=("parallel",)),
        cost_estimate=cost,
    )(x_bf16, *vmem_params, b5)

    # Rows of `out` are the batch in order (tile i holds rows i*TB..i*TB+TB-1);
    # drop padding and restore the (B, 1) column shape.
    return out.reshape(B_pad)[:B].reshape(B, 1)


def init_params(key, input_dim):
    """Deterministic init mirroring the PyTorch layer shapes.

    PyTorch nn.Linear(in, out) has weight (out, in); we store the transpose
    (in, out) so the kernel can do x @ W directly.
    """
    dims = [(input_dim, 128), (128, 256), (256, 128), (128, 64), (64, 1)]
    params = {}
    for i, (din, dout) in enumerate(dims, start=1):
        key, kw, kb = jax.random.split(key, 3)
        bound = 1.0 / jnp.sqrt(din)  # matches PyTorch default U(-1/sqrt(in), .)
        params[f"w{i}"] = jax.random.uniform(
            kw, (din, dout), jnp.float32, minval=-bound, maxval=bound)
        params[f"b{i}"] = jax.random.uniform(
            kb, (1, dout), jnp.float32, minval=-bound, maxval=bound)
    return params


def reference_forward(x, params):
    """Pure-JAX reference with the same numerics (bf16 dots, f32 accum)."""
    def dot_bf16(a, w):
        return jnp.dot(a.astype(jnp.bfloat16), w.astype(jnp.bfloat16),
                       preferred_element_type=jnp.float32)
    h = jnp.maximum(dot_bf16(x, params["w1"]) + params["b1"], 0.0)
    h = jnp.maximum(dot_bf16(h, params["w2"]) + params["b2"], 0.0)
    h = jnp.maximum(dot_bf16(h, params["w3"]) + params["b3"], 0.0)
    h = jnp.maximum(dot_bf16(h, params["w4"]) + params["b4"], 0.0)
    return dot_bf16(h, params["w5"]) + params["b5"]


if __name__ == "__main__":
    key = jax.random.PRNGKey(0)
    input_dim = 32
    batch = 8

    key, kx = jax.random.split(key)
    x = jax.random.normal(kx, (batch, input_dim), jnp.float32)
    params = init_params(key, input_dim)

    out = io_neural_network(x, params)
    out = jax.block_until_ready(out)

    ref = reference_forward(x, params)
    assert out.shape == (batch, 1), out.shape
    assert jnp.allclose(out, ref, atol=2e-3, rtol=2e-3), (
        f"max err {jnp.max(jnp.abs(out - ref))}")

    print("KERNEL_OK")
</pallas_src>

<mosaic_0001>
module attributes {stable_mosaic.version = 11 : i64} {
  func.func @_mlp_kernel(%arg0: i32, %arg1: memref<16x32xbf16, #tpu.memory_space<vmem>>, %arg2: memref<32x128xbf16, #tpu.memory_space<vmem>>, %arg3: memref<1x128xf32, #tpu.memory_space<vmem>>, %arg4: memref<128x256xbf16, #tpu.memory_space<vmem>>, %arg5: memref<1x256xf32, #tpu.memory_space<vmem>>, %arg6: memref<256x128xbf16, #tpu.memory_space<vmem>>, %arg7: memref<1x128xf32, #tpu.memory_space<vmem>>, %arg8: memref<128x64xbf16, #tpu.memory_space<vmem>>, %arg9: memref<1x64xf32, #tpu.memory_space<vmem>>, %arg10: memref<1x64xbf16, #tpu.memory_space<vmem>>, %arg11: memref<1x1xf32, #tpu.memory_space<smem>>, %arg12: memref<1x16xf32, #tpu.memory_space<vmem>>) attributes {dimension_semantics = [#tpu.dimension_semantics<parallel>], iteration_bounds = array<i64: 1>, scalar_prefetch = 0 : i64, scratch_operands = 0 : i64, tpu.core_type = #tpu.core_type<tc>, window_params = [{transform_indices = @transform_0, window_bounds = array<i64: 16, 32>}, {pipeline_mode = #tpu.pipeline_mode<synchronous>, transform_indices = @transform_1, window_bounds = array<i64: 32, 128>}, {pipeline_mode = #tpu.pipeline_mode<synchronous>, transform_indices = @transform_2, window_bounds = array<i64: 1, 128>}, {pipeline_mode = #tpu.pipeline_mode<synchronous>, transform_indices = @transform_3, window_bounds = array<i64: 128, 256>}, {pipeline_mode = #tpu.pipeline_mode<synchronous>, transform_indices = @transform_4, window_bounds = array<i64: 1, 256>}, {pipeline_mode = #tpu.pipeline_mode<synchronous>, transform_indices = @transform_5, window_bounds = array<i64: 256, 128>}, {pipeline_mode = #tpu.pipeline_mode<synchronous>, transform_indices = @transform_6, window_bounds = array<i64: 1, 128>}, {pipeline_mode = #tpu.pipeline_mode<synchronous>, transform_indices = @transform_7, window_bounds = array<i64: 128, 64>}, {pipeline_mode = #tpu.pipeline_mode<synchronous>, transform_indices = @transform_8, window_bounds = array<i64: 1, 64>}, {pipeline_mode = #tpu.pipeline_mode<synchronous>, transform_indices = @transform_9, window_bounds = array<i64: 1, 64>}, {transform_indices = @transform_10, window_bounds = array<i64: 1, 1>}, {transform_indices = @transform_11, window_bounds = array<i64: 1, 16>}]} {
    %c0 = arith.constant 0 : index
    %c0_0 = arith.constant 0 : index
    %0 = memref.load %arg11[%c0, %c0_0] : memref<1x1xf32, #tpu.memory_space<smem>>
    %c0_1 = arith.constant 0 : index
    %c0_2 = arith.constant 0 : index
    %1 = vector.load %arg1[%c0_1, %c0_2] : memref<16x32xbf16, #tpu.memory_space<vmem>>, vector<16x32xbf16>
    %c0_3 = arith.constant 0 : index
    %c0_4 = arith.constant 0 : index
    %2 = vector.load %arg2[%c0_3, %c0_4] : memref<32x128xbf16, #tpu.memory_space<vmem>>, vector<32x128xbf16>
    %cst = arith.constant dense<0.000000e+00> : vector<16x128xf32>
    %3 = tpu.matmul %1, %2, %cst {dimension_numbers = #tpu.dot_dimension_numbers<[1], [0], [0], [1], [0, 0, 1, 1], [], []>} : vector<16x32xbf16>, vector<32x128xbf16>, vector<16x128xf32> -> vector<16x128xf32>
    %c0_5 = arith.constant 0 : index
    %c0_6 = arith.constant 0 : index
    %4 = vector.load %arg3[%c0_5, %c0_6] : memref<1x128xf32, #tpu.memory_space<vmem>>, vector<1x128xf32>
    %5 = vector.broadcast %4 : vector<1x128xf32> to vector<16x128xf32>
    %6 = arith.addf %3, %5 : vector<16x128xf32>
    %cst_7 = arith.constant 0.000000e+00 : f32
    %7 = vector.broadcast %cst_7 : f32 to vector<16x128xf32>
    %8 = arith.maximumf %6, %7 : vector<16x128xf32>
    %9 = arith.truncf %8 : vector<16x128xf32> to vector<16x128xbf16>
    %c0_8 = arith.constant 0 : index
    %c0_9 = arith.constant 0 : index
    %10 = vector.load %arg4[%c0_8, %c0_9] : memref<128x256xbf16, #tpu.memory_space<vmem>>, vector<128x256xbf16>
    %cst_10 = arith.constant dense<0.000000e+00> : vector<16x256xf32>
    %11 = tpu.matmul %9, %10, %cst_10 {dimension_numbers = #tpu.dot_dimension_numbers<[1], [0], [0], [1], [0, 0, 1, 1], [], []>} : vector<16x128xbf16>, vector<128x256xbf16>, vector<16x256xf32> -> vector<16x256xf32>
    %c0_11 = arith.constant 0 : index
    %c0_12 = arith.constant 0 : index
    %12 = vector.load %arg5[%c0_11, %c0_12] : memref<1x256xf32, #tpu.memory_space<vmem>>, vector<1x256xf32>
    %13 = vector.broadcast %12 : vector<1x256xf32> to vector<16x256xf32>
    %14 = arith.addf %11, %13 : vector<16x256xf32>
    %cst_13 = arith.constant 0.000000e+00 : f32
    %15 = vector.broadcast %cst_13 : f32 to vector<16x256xf32>
    %16 = arith.maximumf %14, %15 : vector<16x256xf32>
    %17 = arith.truncf %16 : vector<16x256xf32> to vector<16x256xbf16>
    %c0_14 = arith.constant 0 : index
    %c0_15 = arith.constant 0 : index
    %18 = vector.load %arg6[%c0_14, %c0_15] : memref<256x128xbf16, #tpu.memory_space<vmem>>, vector<256x128xbf16>
    %cst_16 = arith.constant dense<0.000000e+00> : vector<16x128xf32>
    %19 = tpu.matmul %17, %18, %cst_16 {dimension_numbers = #tpu.dot_dimension_numbers<[1], [0], [0], [1], [0, 0, 1, 1], [], []>} : vector<16x256xbf16>, vector<256x128xbf16>, vector<16x128xf32> -> vector<16x128xf32>
    %c0_17 = arith.constant 0 : index
    %c0_18 = arith.constant 0 : index
    %20 = vector.load %arg7[%c0_17, %c0_18] : memref<1x128xf32, #tpu.memory_space<vmem>>, vector<1x128xf32>
    %21 = vector.broadcast %20 : vector<1x128xf32> to vector<16x128xf32>
    %22 = arith.addf %19, %21 : vector<16x128xf32>
    %cst_19 = arith.constant 0.000000e+00 : f32
    %23 = vector.broadcast %cst_19 : f32 to vector<16x128xf32>
    %24 = arith.maximumf %22, %23 : vector<16x128xf32>
    %25 = arith.truncf %24 : vector<16x128xf32> to vector<16x128xbf16>
    %c0_20 = arith.constant 0 : index
    %c0_21 = arith.constant 0 : index
    %26 = vector.load %arg8[%c0_20, %c0_21] : memref<128x64xbf16, #tpu.memory_space<vmem>>, vector<128x64xbf16>
    %cst_22 = arith.constant dense<0.000000e+00> : vector<16x64xf32>
    %27 = tpu.matmul %25, %26, %cst_22 {dimension_numbers = #tpu.dot_dimension_numbers<[1], [0], [0], [1], [0, 0, 1, 1], [], []>} : vector<16x128xbf16>, vector<128x64xbf16>, vector<16x64xf32> -> vector<16x64xf32>
    %c0_23 = arith.constant 0 : index
    %c0_24 = arith.constant 0 : index
    %28 = vector.load %arg9[%c0_23, %c0_24] : memref<1x64xf32, #tpu.memory_space<vmem>>, vector<1x64xf32>
    %29 = vector.broadcast %28 : vector<1x64xf32> to vector<16x64xf32>
    %30 = arith.addf %27, %29 : vector<16x64xf32>
    %cst_25 = arith.constant 0.000000e+00 : f32
    %31 = vector.broadcast %cst_25 : f32 to vector<16x64xf32>
    %32 = arith.maximumf %30, %31 : vector<16x64xf32>
    %c0_26 = arith.constant 0 : index
    %c0_27 = arith.constant 0 : index
    %33 = vector.load %arg10[%c0_26, %c0_27] : memref<1x64xbf16, #tpu.memory_space<vmem>>, vector<1x64xbf16>
    %34 = arith.truncf %32 : vector<16x64xf32> to vector<16x64xbf16>
    %cst_28 = arith.constant dense<0.000000e+00> : vector<1x16xf32>
    %35 = tpu.matmul %33, %34, %cst_28 {dimension_numbers = #tpu.dot_dimension_numbers<[1], [1], [0], [0], [0, 0, 1, 0], [], []>} : vector<1x64xbf16>, vector<16x64xbf16>, vector<1x16xf32> -> vector<1x16xf32>
    %36 = vector.broadcast %0 : f32 to vector<1x16xf32>
    %37 = arith.addf %35, %36 : vector<1x16xf32>
    %c0_29 = arith.constant 0 : index
    %c0_30 = arith.constant 0 : index
    %38 = vector.load %arg12[%c0_29, %c0_30] : memref<1x16xf32, #tpu.memory_space<vmem>>, vector<1x16xf32>
    tpu.vector_store %arg12[%c0_29, %c0_30], %37 {strides = array<i32>} : memref<1x16xf32, #tpu.memory_space<vmem>>, vector<1x16xf32>,
    return
  }
  func.func @transform_0(%arg0: i32) -> (i32, i32) {
    %c0_i32 = arith.constant 0 : i32
    %c0_i32_0 = arith.constant 0 : i32
    return %arg0, %c0_i32 : i32, i32
  }
  func.func @transform_1(%arg0: i32) -> (i32, i32) {
    %c0_i32 = arith.constant 0 : i32
    %c0_i32_0 = arith.constant 0 : i32
    %c0_i32_1 = arith.constant 0 : i32
    return %c0_i32, %c0_i32_0 : i32, i32
  }
  func.func @transform_2(%arg0: i32) -> (i32, i32) {
    %c0_i32 = arith.constant 0 : i32
    %c0_i32_0 = arith.constant 0 : i32
    %c0_i32_1 = arith.constant 0 : i32
    return %c0_i32, %c0_i32_0 : i32, i32
  }
  func.func @transform_3(%arg0: i32) -> (i32, i32) {
    %c0_i32 = arith.constant 0 : i32
    %c0_i32_0 = arith.constant 0 : i32
    %c0_i32_1 = arith.constant 0 : i32
    return %c0_i32, %c0_i32_0 : i32, i32
  }
  func.func @transform_4(%arg0: i32) -> (i32, i32) {
    %c0_i32 = arith.constant 0 : i32
    %c0_i32_0 = arith.constant 0 : i32
    %c0_i32_1 = arith.constant 0 : i32
    return %c0_i32, %c0_i32_0 : i32, i32
  }
  func.func @transform_5(%arg0: i32) -> (i32, i32) {
    %c0_i32 = arith.constant 0 : i32
    %c0_i32_0 = arith.constant 0 : i32
    %c0_i32_1 = arith.constant 0 : i32
    return %c0_i32, %c0_i32_0 : i32, i32
  }
  func.func @transform_6(%arg0: i32) -> (i32, i32) {
    %c0_i32 = arith.constant 0 : i32
    %c0_i32_0 = arith.constant 0 : i32
    %c0_i32_1 = arith.constant 0 : i32
    return %c0_i32, %c0_i32_0 : i32, i32
  }
  func.func @transform_7(%arg0: i32) -> (i32, i32) {
    %c0_i32 = arith.constant 0 : i32
    %c0_i32_0 = arith.constant 0 : i32
    %c0_i32_1 = arith.constant 0 : i32
    return %c0_i32, %c0_i32_0 : i32, i32
  }
  func.func @transform_8(%arg0: i32) -> (i32, i32) {
    %c0_i32 = arith.constant 0 : i32
    %c0_i32_0 = arith.constant 0 : i32
    %c0_i32_1 = arith.constant 0 : i32
    return %c0_i32, %c0_i32_0 : i32, i32
  }
  func.func @transform_9(%arg0: i32) -> (i32, i32) {
    %c0_i32 = arith.constant 0 : i32
    %c0_i32_0 = arith.constant 0 : i32
    %c0_i32_1 = arith.constant 0 : i32
    return %c0_i32, %c0_i32_0 : i32, i32
  }
  func.func @transform_10(%arg0: i32) -> (i32, i32) {
    %c0_i32 = arith.constant 0 : i32
    %c0_i32_0 = arith.constant 0 : i32
    %c0_i32_1 = arith.constant 0 : i32
    return %c0_i32, %c0_i32_0 : i32, i32
  }
  func.func @transform_11(%arg0: i32) -> (i32, i32) {
    %c0_i32 = arith.constant 0 : i32
    %c0_i32_0 = arith.constant 0 : i32
    return %arg0, %c0_i32 : i32, i32
  }
}

</mosaic_0001>

<llo_original>
// kernel: tpu_custom_call.1
$region0: #{tpu_custom_call.1}
  #allocation0 [shape = 'u32[]', space=smem, size = 0x4, offset = 0x4, fixed_abs, tag = 'smem constant byte address 0x4 - core index']
  #allocation1 [shape = 'u32[144,128]{1,0:T(1,128)}', space=vmem, size = 0x12000, scoped, tag = 'internal scratch']
  #allocation2 [shape = 'f32[1,1]{1,0:T(1,128)S(6)}', space=smem, size = 0x200, scoped, tag = 'scoped memory for tpu_custom_call.1']
  %s0 = inlined_call_operand.vmem [shape: bf16[16,32], index: 0, kind: input, shape index: {}]
  %s1 = inlined_call_operand.vmem [shape: bf16[32,128], index: 1, kind: input, shape index: {}]
  %s2 = inlined_call_operand.vmem [shape: f32[1,128], index: 2, kind: input, shape index: {}]
  %s3 = inlined_call_operand.hbm [shape: bf16[128,256], index: 3, kind: input, shape index: {}]
  %s4 = inlined_call_operand.vmem [shape: f32[1,256], index: 4, kind: input, shape index: {}]
  %s5 = inlined_call_operand.hbm [shape: bf16[256,128], index: 5, kind: input, shape index: {}]
  %s6 = inlined_call_operand.vmem [shape: f32[1,128], index: 6, kind: input, shape index: {}]
  %s7 = inlined_call_operand.vmem [shape: bf16[128,64], index: 7, kind: input, shape index: {}]
  %s8 = inlined_call_operand.vmem [shape: f32[1,64], index: 8, kind: input, shape index: {}]
  %s9 = inlined_call_operand.vmem [shape: bf16[1,64], index: 9, kind: input, shape index: {}]
  %s10 = inlined_call_operand.<no memory space> [shape: f32[1,1], index: 10, kind: input, shape index: {}]
  %s11 = inlined_call_operand.hbm [shape: f32[1,16], index: 11, kind: output, shape index: {}]
  %s12 = sld [smem:[#allocation0]]
  $region62: #{tpu_custom_call.1} parent=0
    _
  %s14 = ssub.s32 1, %s12
  %s15 = scalar_select 0, %s14, %s12
  %16 = sst [smem:[#allocation2]] %s10
  $region1: #{tpu_custom_call.1} parent=0
    #allocation3 [shape = 'u8[65536]{0}', space=vmem, size = 0x10000, scoped, tag = 'input window, operand 3, single buffered']
    #allocation4 [shape = 's32[1]{0}', space=sflag, size = 0x4, scoped, tag = 'scoped memory for tpu_custom_call.1']
    #allocation5 [shape = 's32[1]{0}', space=sflag, size = 0x4, scoped, tag = 'scoped memory for tpu_custom_call.1']
    #allocation6 [shape = 'u8[65536]{0}', space=vmem, size = 0x10000, scoped, tag = 'input window, operand 5, single buffered']
    #allocation7 [shape = 's32[1]{0}', space=sflag, size = 0x4, scoped, tag = 'scoped memory for tpu_custom_call.1']
    #allocation8 [shape = 'u8[512]{0}', space=vmem, size = 0x400, scoped, tag = 'output window, operand 0, single buffered']
    %17 = vsyncpa [#allocation4], 0
    %18 = vsyncpa [#allocation7], 0
    %19 = vsyncpa [#allocation5], 0
    // Predicated region
    $region2: #{tpu_custom_call.1} parent=1 // pred_check
      _
    $region3: #{tpu_custom_call.1} parent=1 // pred_check_branch
      %21 = sbr.rel (0) target = $region5
    $region4: #{tpu_custom_call.1} parent=1 // pred_region
      _
    $region5: #{tpu_custom_call.1} parent=1 // pred_fallthru
      _
    // Predicated region
    $region6: #{tpu_custom_call.1} parent=1 // pred_check
      _
    $region7: #{tpu_custom_call.1} parent=1 // pred_check_branch
      %23 = sbr.rel (0) target = $region9
    $region8: #{tpu_custom_call.1} parent=1 // pred_region
      _
    $region9: #{tpu_custom_call.1} parent=1 // pred_fallthru
      _
    // Predicated region
    $region10: #{tpu_custom_call.1} parent=1 // pred_check
      _
    $region11: #{tpu_custom_call.1} parent=1 // pred_check_branch
      %25 = sbr.rel (0) target = $region13
    $region12: #{tpu_custom_call.1} parent=1 // pred_region
      _
    $region13: #{tpu_custom_call.1} parent=1 // pred_fallthru
      _
    // Predicated region
    $region14: #{tpu_custom_call.1} parent=1 // pred_check
      _
    $region15: #{tpu_custom_call.1} parent=1 // pred_check_branch
      %27 = sbr.rel (0) target = $region17
    $region16: #{tpu_custom_call.1} parent=1 // pred_region
      %s29 = ssub.s32 2048, 2048
      %30 = vsyncadd [#allocation4], %s29
      %s31 = sshll.u32 [#allocation3], 4
      %s32 = int_to_ptr.vmem [resolvable:$true] %s31
      %37 = dma.hbm_to_vmem [thread:$0]  %s3, 2048, %s32, [#allocation4], 128, 128, 8
    $region17: #{tpu_custom_call.1} parent=1 // pred_fallthru
      _
    // Predicated region
    $region18: #{tpu_custom_call.1} parent=1 // pred_check
      _
    $region19: #{tpu_custom_call.1} parent=1 // pred_check_branch
      %39 = sbr.rel (0) target = $region21
    $region20: #{tpu_custom_call.1} parent=1 // pred_region
      _
    $region21: #{tpu_custom_call.1} parent=1 // pred_fallthru
      _
    // Predicated region
    $region22: #{tpu_custom_call.1} parent=1 // pred_check
      _
    $region23: #{tpu_custom_call.1} parent=1 // pred_check_branch
      %41 = sbr.rel (0) target = $region25
    $region24: #{tpu_custom_call.1} parent=1 // pred_region
      %s43 = ssub.s32 2048, 2048
      %44 = vsyncadd [#allocation7], %s43
      %s45 = sshll.u32 [#allocation6], 4
      %s46 = int_to_ptr.vmem [resolvable:$true] %s45
      %51 = dma.hbm_to_vmem [thread:$0]  %s5, 2048, %s46, [#allocation7], 64, 64, 4
    $region25: #{tpu_custom_call.1} parent=1 // pred_fallthru
      _
    // Predicated region
    $region26: #{tpu_custom_call.1} parent=1 // pred_check
      _
    $region27: #{tpu_custom_call.1} parent=1 // pred_check_branch
      %53 = sbr.rel (0) target = $region29
    $region28: #{tpu_custom_call.1} parent=1 // pred_region
      _
    $region29: #{tpu_custom_call.1} parent=1 // pred_fallthru
      _
    // Predicated region
    $region30: #{tpu_custom_call.1} parent=1 // pred_check
      _
    $region31: #{tpu_custom_call.1} parent=1 // pred_check_branch
      %55 = sbr.rel (0) target = $region33
    $region32: #{tpu_custom_call.1} parent=1 // pred_region
      _
    $region33: #{tpu_custom_call.1} parent=1 // pred_fallthru
      _
    // Predicated region
    $region34: #{tpu_custom_call.1} parent=1 // pred_check
      _
    $region35: #{tpu_custom_call.1} parent=1 // pred_check_branch
      %57 = sbr.rel (0) target = $region37
    $region36: #{tpu_custom_call.1} parent=1 // pred_region
      _
    $region37: #{tpu_custom_call.1} parent=1 // pred_fallthru
      _
    // Predicated region
    $region38: #{tpu_custom_call.1} parent=1 // pred_check
      _
    $region39: #{tpu_custom_call.1} parent=1 // pred_check_branch
      %59 = sbr.rel (0) target = $region41
    $region40: #{tpu_custom_call.1} parent=1 // pred_region
      _
    $region41: #{tpu_custom_call.1} parent=1 // pred_fallthru
      _
    // Predicated region
    $region42: #{tpu_custom_call.1} parent=1 // pred_check
      _
    $region43: #{tpu_custom_call.1} parent=1 // pred_check_branch
      %61 = sbr.rel (0) target = $region45
    $region44: #{tpu_custom_call.1} parent=1 // pred_region
      _
    $region45: #{tpu_custom_call.1} parent=1 // pred_fallthru
      _
    // Predicated region
    $region46: #{tpu_custom_call.1} parent=1 // pred_check
      _
    $region47: #{tpu_custom_call.1} parent=1 // pred_check_branch
      %63 = sbr.rel (0) target = $region49
    $region48: #{tpu_custom_call.1} parent=1 // pred_region
      %64 = dma.done [#allocation4], 2048
    $region49: #{tpu_custom_call.1} parent=1 // pred_fallthru
      _
    // Predicated region
    $region50: #{tpu_custom_call.1} parent=1 // pred_check
      _
    $region51: #{tpu_custom_call.1} parent=1 // pred_check_branch
      %66 = sbr.rel (0) target = $region53
    $region52: #{tpu_custom_call.1} parent=1 // pred_region
      %67 = dma.done [#allocation7], 2048
    $region53: #{tpu_custom_call.1} parent=1 // pred_fallthru
      _
    %s69 = sld [smem:[#allocation2]]
    %v70 = vld [vmem:[%s0] sm:$0xf]
    %v71 = vld [vmem:[%s0 + $0x4] sm:$0xf]
    %v72 = vld [vmem:[%s1] sm:$0xf]
    %v73 = vld [vmem:[%s1 + $0x4] sm:$0xf]
    %v74 = vld [vmem:[%s1 + $0x8] sm:$0xf]
    %v75 = vld [vmem:[%s1 + $0xc] sm:$0xf]
    %v76 = vld [vmem:[%s2] sm:$0x1]
    %v78 = vlaneseq
    %v79 = vshrl.u32 %v78, 7
    %v80 = vsub.s32 0, %v79
    %v81 = vrot.slane %v76, %v80
    %v85 = vunpack.c.l.b16 %v70
    %v86 = vunpack.c.l.b16 %v71
    %v87 = vpack.c.b16 %v86, %v85
    %v92 = vunpack.c.l.b16 %v72
    %v93 = vunpack.c.l.b16 %v73
    %v94 = vunpack.c.l.b16 %v74
    %v95 = vunpack.c.l.b16 %v75
    %v96 = vpack.c.b16 %v93, %v92
    %v97 = vpack.c.b16 %v95, %v94
    %vm100 = vcmask 261120
    %v102 = vsel %vm100, %v87, 0
    %104 = vmatprep.subr.bf16.mxu0 0
    %105 = vmatpush1.bf16.msra.mxu0 0
    %106 = vmatprep.subr.bf16.mxu0 0
    %107 = vmatpush1.bf16.msra.mxu0 0
    %108 = vmatprep.subr.bf16.mxu0 0
    %109 = vmatpush1.bf16.msra.mxu0 0
    %110 = vmatprep.subr.bf16.mxu0 0
    %111 = vmatpush1.bf16.msra.mxu0 0
    %112 = vmatprep.subr.bf16.mxu0 0
    %113 = vmatpush1.bf16.msra.mxu0 0
    %114 = vmatprep.subr.bf16.mxu0 0
    %115 = vmatpush1.bf16.msra.mxu0 0
    %116 = vmatprep.subr.bf16.mxu0 0
    %117 = vmatpush1.bf16.msra.mxu0 %v97
    %118 = vmatprep.subr.bf16.mxu0 0
    %119 = vmatpush1.bf16.msra.mxu0 %v96
    %120 = vmatprep.subr.bf16.mxu0 0
    %121 = vmatpush2.bf16.msra.mxu0 0
    %122 = vmatprep.subr.bf16.mxu0 0
    %123 = vmatpush2.bf16.msra.mxu0 0
    %124 = vmatprep.subr.bf16.mxu0 0
    %125 = vmatpush2.bf16.msra.mxu0 0
    %126 = vmatprep.subr.bf16.mxu0 0
    %127 = vmatpush2.bf16.msra.mxu0 0
    %128 = vmatprep.subr.bf16.mxu0 0
    %129 = vmatpush2.bf16.msra.mxu0 0
    %130 = vmatprep.subr.bf16.mxu0 0
    %131 = vmatpush2.bf16.msra.mxu0 0
    %132 = vmatprep.subr.bf16.mxu0 0
    %133 = vmatpush2.bf16.msra.mxu0 0
    %134 = vmatprep.subr.bf16.mxu0 0
    %135 = vmatpush2.bf16.msra.mxu0 0
    %136 = vmatprep.mubr.bf16.mxu0 0
    %137 = vmatmul.mubr.bf16.gmra.mxu0 %v102
    %v138 = vpop.f32.mrf.mxu0
    %v139 = vadd.f32 %v81, %v138
    %v140 = vpop.f32.mrf.mxu0
    %v141 = vpop.f32.mrf.mxu0
    %v142 = vadd.f32 %v81, %v141
    %v143 = vpop.f32.mrf.mxu0
    %144 = vdwg.mxu0
    %v145 = vmax.f32 %v139, 0.0
    %v146 = vmax.f32 %v142, 0.0
    %v147 = vpack.c.bf16 %v146, %v145
    %v148 = vld [vmem:[#allocation3] sm:$0xff]
    %v149 = vld [vmem:[#allocation3 + $0x8] sm:$0xff]
    %v150 = vld [vmem:[#allocation3 + $0x10] sm:$0xff]
    %v151 = vld [vmem:[#allocation3 + $0x18] sm:$0xff]
    %v152 = vld [vmem:[#allocation3 + $0x20] sm:$0xff]
    %v153 = vld [vmem:[#allocation3 + $0x28] sm:$0xff]
    %v154 = vld [vmem:[#allocation3 + $0x30] sm:$0xff]
    %v155 = vld [vmem:[#allocation3 + $0x38] sm:$0xff]
    %v156 = vld [vmem:[#allocation3 + $0x40] sm:$0xff]
    %v157 = vld [vmem:[#allocation3 + $0x48] sm:$0xff]
    %v158 = vld [vmem:[#allocation3 + $0x50] sm:$0xff]
    %v159 = vld [vmem:[#allocation3 + $0x58] sm:$0xff]
    %v160 = vld [vmem:[#allocation3 + $0x60] sm:$0xff]
    %v161 = vld [vmem:[#allocation3 + $0x68] sm:$0xff]
    %v162 = vld [vmem:[#allocation3 + $0x70] sm:$0xff]
    %v163 = vld [vmem:[#allocation3 + $0x78] sm:$0xff]
    %v164 = vld [vmem:[%s4] sm:$0x3]
    %v166 = vlaneseq
    %v167 = vshrl.u32 %v166, 7
    %v168 = vsub.s32 0, %v167
    %v169 = vrot.slane %v164, %v168
    %v170 = vlaneseq
    %v171 = vshrl.u32 %v170, 7
    %v172 = vsub.s32 1, %v171
    %v173 = vrot.slane %v164, %v172
    %v192 = vunpack.c.l.b16 %v148
    %v193 = vunpack.c.h.b16 %v148
    %v194 = vunpack.c.l.b16 %v149
    %v195 = vunpack.c.h.b16 %v149
    %v196 = vunpack.c.l.b16 %v150
    %v197 = vunpack.c.h.b16 %v150
    %v198 = vunpack.c.l.b16 %v151
    %v199 = vunpack.c.h.b16 %v151
    %v200 = vunpack.c.l.b16 %v152
    %v201 = vunpack.c.h.b16 %v152
    %v202 = vunpack.c.l.b16 %v153
    %v203 = vunpack.c.h.b16 %v153
    %v204 = vunpack.c.l.b16 %v154
    %v205 = vunpack.c.h.b16 %v154
    %v206 = vunpack.c.l.b16 %v155
    %v207 = vunpack.c.h.b16 %v155
    %v208 = vunpack.c.l.b16 %v156
    %v209 = vunpack.c.h.b16 %v156
    %v210 = vunpack.c.l.b16 %v157
    %v211 = vunpack.c.h.b16 %v157
    %v212 = vunpack.c.l.b16 %v158
    %v213 = vunpack.c.h.b16 %v158
    %v214 = vunpack.c.l.b16 %v159
    %v215 = vunpack.c.h.b16 %v159
    %v216 = vunpack.c.l.b16 %v160
    %v217 = vunpack.c.h.b16 %v160
    %v218 = vunpack.c.l.b16 %v161
    %v219 = vunpack.c.h.b16 %v161
    %v220 = vunpack.c.l.b16 %v162
    %v221 = vunpack.c.h.b16 %v162
    %v222 = vunpack.c.l.b16 %v163
    %v223 = vunpack.c.h.b16 %v163
    %v224 = vpack.c.b16 %v194, %v192
    %v225 = vpack.c.b16 %v195, %v193
    %v226 = vpack.c.b16 %v198, %v196
    %v227 = vpack.c.b16 %v199, %v197
    %v228 = vpack.c.b16 %v202, %v200
    %v229 = vpack.c.b16 %v203, %v201
    %v230 = vpack.c.b16 %v206, %v204
    %v231 = vpack.c.b16 %v207, %v205
    %v232 = vpack.c.b16 %v210, %v208
    %v233 = vpack.c.b16 %v211, %v209
    %v234 = vpack.c.b16 %v214, %v212
    %v235 = vpack.c.b16 %v215, %v213
    %v236 = vpack.c.b16 %v218, %v216
    %v237 = vpack.c.b16 %v219, %v217
    %v238 = vpack.c.b16 %v222, %v220
    %v239 = vpack.c.b16 %v223, %v221
    %256 = vmatprep.subr.bf16.mxu0 %v239
    %257 = vmatpush1.bf16.msra.mxu0 %v238
    %258 = vmatprep.subr.bf16.mxu0 %v237
    %259 = vmatpush1.bf16.msra.mxu0 %v236
    %260 = vmatprep.subr.bf16.mxu0 %v235
    %261 = vmatpush1.bf16.msra.mxu0 %v234
    %262 = vmatprep.subr.bf16.mxu0 %v233
    %263 = vmatpush1.bf16.msra.mxu0 %v232
    %264 = vmatprep.subr.bf16.mxu0 %v231
    %265 = vmatpush1.bf16.msra.mxu0 %v230
    %266 = vmatprep.subr.bf16.mxu0 %v229
    %267 = vmatpush1.bf16.msra.mxu0 %v228
    %268 = vmatprep.subr.bf16.mxu0 %v227
    %269 = vmatpush1.bf16.msra.mxu0 %v226
    %270 = vmatprep.subr.bf16.mxu0 %v225
    %271 = vmatpush1.bf16.msra.mxu0 %v224
    %272 = vmatprep.subr.bf16.mxu0 0
    %273 = vmatpush2.bf16.msra.mxu0 0
    %274 = vmatprep.subr.bf16.mxu0 0
    %275 = vmatpush2.bf16.msra.mxu0 0
    %276 = vmatprep.subr.bf16.mxu0 0
    %277 = vmatpush2.bf16.msra.mxu0 0
    %278 = vmatprep.subr.bf16.mxu0 0
    %279 = vmatpush2.bf16.msra.mxu0 0
    %280 = vmatprep.subr.bf16.mxu0 0
    %281 = vmatpush2.bf16.msra.mxu0 0
    %282 = vmatprep.subr.bf16.mxu0 0
    %283 = vmatpush2.bf16.msra.mxu0 0
    %284 = vmatprep.subr.bf16.mxu0 0
    %285 = vmatpush2.bf16.msra.mxu0 0
    %286 = vmatprep.subr.bf16.mxu0 0
    %287 = vmatpush2.bf16.msra.mxu0 0
    %288 = vmatprep.mubr.bf16.mxu0 0
    %289 = vmatmul.mubr.bf16.gmra.mxu0 %v147
    %v290 = vpop.f32.mrf.mxu0
    %v291 = vadd.f32 %v169, %v290
    %v292 = vpop.f32.mrf.mxu0
    %v293 = vadd.f32 %v173, %v292
    %v294 = vpop.f32.mrf.mxu0
    %v295 = vadd.f32 %v169, %v294
    %v296 = vpop.f32.mrf.mxu0
    %v297 = vadd.f32 %v173, %v296
    %298 = vdwg.mxu0
    %v299 = vmax.f32 %v291, 0.0
    %v300 = vmax.f32 %v293, 0.0
    %v301 = vmax.f32 %v295, 0.0
    %v302 = vmax.f32 %v297, 0.0
    %v303 = vpack.c.bf16 %v301, %v299
    %v304 = vpack.c.bf16 %v302, %v300
    %v305 = vld [vmem:[#allocation6] sm:$0xf]
    %v306 = vld [vmem:[#allocation6 + $0x4] sm:$0xf]
    %v307 = vld [vmem:[#allocation6 + $0x8] sm:$0xf]
    %v308 = vld [vmem:[#allocation6 + $0xc] sm:$0xf]
    %v309 = vld [vmem:[#allocation6 + $0x10] sm:$0xf]
    %v310 = vld [vmem:[#allocation6 + $0x14] sm:$0xf]
    %v311 = vld [vmem:[#allocation6 + $0x18] sm:$0xf]
    %v312 = vld [vmem:[#allocation6 + $0x1c] sm:$0xf]
    %v313 = vld [vmem:[#allocation6 + $0x20] sm:$0xf]
    %v314 = vld [vmem:[#allocation6 + $0x24] sm:$0xf]
    %v315 = vld [vmem:[#allocation6 + $0x28] sm:$0xf]
    %v316 = vld [vmem:[#allocation6 + $0x2c] sm:$0xf]
    %v317 = vld [vmem:[#allocation6 + $0x30] sm:$0xf]
    %v318 = vld [vmem:[#allocation6 + $0x34] sm:$0xf]
    %v319 = vld [vmem:[#allocation6 + $0x38] sm:$0xf]
    %v320 = vld [vmem:[#allocation6 + $0x3c] sm:$0xf]
    %v321 = vld [vmem:[#allocation6 + $0x40] sm:$0xf]
    %v322 = vld [vmem:[#allocation6 + $0x44] sm:$0xf]
    %v323 = vld [vmem:[#allocation6 + $0x48] sm:$0xf]
    %v324 = vld [vmem:[#allocation6 + $0x4c] sm:$0xf]
    %v325 = vld [vmem:[#allocation6 + $0x50] sm:$0xf]
    %v326 = vld [vmem:[#allocation6 + $0x54] sm:$0xf]
    %v327 = vld [vmem:[#allocation6 + $0x58] sm:$0xf]
    %v328 = vld [vmem:[#allocation6 + $0x5c] sm:$0xf]
    %v329 = vld [vmem:[#allocation6 + $0x60] sm:$0xf]
    %v330 = vld [vmem:[#allocation6 + $0x64] sm:$0xf]
    %v331 = vld [vmem:[#allocation6 + $0x68] sm:$0xf]
    %v332 = vld [vmem:[#allocation6 + $0x6c] sm:$0xf]
    %v333 = vld [vmem:[#allocation6 + $0x70] sm:$0xf]
    %v334 = vld [vmem:[#allocation6 + $0x74] sm:$0xf]
    %v335 = vld [vmem:[#allocation6 + $0x78] sm:$0xf]
    %v336 = vld [vmem:[#allocation6 + $0x7c] sm:$0xf]
    %v337 = vld [vmem:[%s6] sm:$0x1]
    %v339 = vlaneseq
    %v340 = vshrl.u32 %v339, 7
    %v341 = vsub.s32 0, %v340
    %v342 = vrot.slane %v337, %v341
    %v376 = vunpack.c.l.b16 %v305
    %v377 = vunpack.c.l.b16 %v306
    %v378 = vunpack.c.l.b16 %v307
    %v379 = vunpack.c.l.b16 %v308
    %v380 = vunpack.c.l.b16 %v309
    %v381 = vunpack.c.l.b16 %v310
    %v382 = vunpack.c.l.b16 %v311
    %v383 = vunpack.c.l.b16 %v312
    %v384 = vunpack.c.l.b16 %v313
    %v385 = vunpack.c.l.b16 %v314
    %v386 = vunpack.c.l.b16 %v315
    %v387 = vunpack.c.l.b16 %v316
    %v388 = vunpack.c.l.b16 %v317
    %v389 = vunpack.c.l.b16 %v318
    %v390 = vunpack.c.l.b16 %v319
    %v391 = vunpack.c.l.b16 %v320
    %v392 = vunpack.c.l.b16 %v321
    %v393 = vunpack.c.l.b16 %v322
    %v394 = vunpack.c.l.b16 %v323
    %v395 = vunpack.c.l.b16 %v324
    %v396 = vunpack.c.l.b16 %v325
    %v397 = vunpack.c.l.b16 %v326
    %v398 = vunpack.c.l.b16 %v327
    %v399 = vunpack.c.l.b16 %v328
    %v400 = vunpack.c.l.b16 %v329
    %v401 = vunpack.c.l.b16 %v330
    %v402 = vunpack.c.l.b16 %v331
    %v403 = vunpack.c.l.b16 %v332
    %v404 = vunpack.c.l.b16 %v333
    %v405 = vunpack.c.l.b16 %v334
    %v406 = vunpack.c.l.b16 %v335
    %v407 = vunpack.c.l.b16 %v336
    %v408 = vpack.c.b16 %v377, %v376
    %v409 = vpack.c.b16 %v379, %v378
    %v410 = vpack.c.b16 %v381, %v380
    %v411 = vpack.c.b16 %v383, %v382
    %v412 = vpack.c.b16 %v385, %v384
    %v413 = vpack.c.b16 %v387, %v386
    %v414 = vpack.c.b16 %v389, %v388
    %v415 = vpack.c.b16 %v391, %v390
    %v416 = vpack.c.b16 %v393, %v392
    %v417 = vpack.c.b16 %v395, %v394
    %v418 = vpack.c.b16 %v397, %v396
    %v419 = vpack.c.b16 %v399, %v398
    %v420 = vpack.c.b16 %v401, %v400
    %v421 = vpack.c.b16 %v403, %v402
    %v422 = vpack.c.b16 %v405, %v404
    %v423 = vpack.c.b16 %v407, %v406
    %440 = vmatprep.subr.bf16.mxu0 0
    %441 = vmatpush1.bf16.msra.mxu0 %v415
    %442 = vmatprep.subr.bf16.mxu0 0
    %443 = vmatpush1.bf16.msra.mxu0 %v414
    %444 = vmatprep.subr.bf16.mxu0 0
    %445 = vmatpush1.bf16.msra.mxu0 %v413
    %446 = vmatprep.subr.bf16.mxu0 0
    %447 = vmatpush1.bf16.msra.mxu0 %v412
    %448 = vmatprep.subr.bf16.mxu0 0
    %449 = vmatpush1.bf16.msra.mxu0 %v411
    %450 = vmatprep.subr.bf16.mxu0 0
    %451 = vmatpush1.bf16.msra.mxu0 %v410
    %452 = vmatprep.subr.bf16.mxu0 0
    %453 = vmatpush1.bf16.msra.mxu0 %v409
    %454 = vmatprep.subr.bf16.mxu0 0
    %455 = vmatpush1.bf16.msra.mxu0 %v408
    %456 = vmatprep.subr.bf16.mxu0 0
    %457 = vmatpush2.bf16.msra.mxu0 %v423
    %458 = vmatprep.subr.bf16.mxu0 0
    %459 = vmatpush2.bf16.msra.mxu0 %v422
    %460 = vmatprep.subr.bf16.mxu0 0
    %461 = vmatpush2.bf16.msra.mxu0 %v421
    %462 = vmatprep.subr.bf16.mxu0 0
    %463 = vmatpush2.bf16.msra.mxu0 %v420
    %464 = vmatprep.subr.bf16.mxu0 0
    %465 = vmatpush2.bf16.msra.mxu0 %v419
    %466 = vmatprep.subr.bf16.mxu0 0
    %467 = vmatpush2.bf16.msra.mxu0 %v418
    %468 = vmatprep.subr.bf16.mxu0 0
    %469 = vmatpush2.bf16.msra.mxu0 %v417
    %470 = vmatprep.subr.bf16.mxu0 0
    %471 = vmatpush2.bf16.msra.mxu0 %v416
    %472 = vmatprep.mubr.bf16.mxu0 %v304
    %473 = vmatmul.mubr.bf16.gmra.mxu0 %v303
    %v474 = vpop.f32.mrf.mxu0
    %v475 = vadd.f32 %v342, %v474
    %v476 = vpop.f32.mrf.mxu0
    %v477 = vpop.f32.mrf.mxu0
    %v478 = vadd.f32 %v342, %v477
    %v479 = vpop.f32.mrf.mxu0
    %480 = vdwg.mxu0
    %v481 = vmax.f32 %v475, 0.0
    %v482 = vmax.f32 %v478, 0.0
    %v483 = vpack.c.bf16 %v482, %v481
    %v484 = vld [vmem:[%s7] sm:$0xf]
    %v485 = vld [vmem:[%s7 + $0x4] sm:$0xf]
    %v486 = vld [vmem:[%s7 + $0x8] sm:$0xf]
    %v487 = vld [vmem:[%s7 + $0xc] sm:$0xf]
    %v488 = vld [vmem:[%s7 + $0x10] sm:$0xf]
    %v489 = vld [vmem:[%s7 + $0x14] sm:$0xf]
    %v490 = vld [vmem:[%s7 + $0x18] sm:$0xf]
    %v491 = vld [vmem:[%s7 + $0x1c] sm:$0xf]
    %v492 = vld [vmem:[%s7 + $0x20] sm:$0xf]
    %v493 = vld [vmem:[%s7 + $0x24] sm:$0xf]
    %v494 = vld [vmem:[%s7 + $0x28] sm:$0xf]
    %v495 = vld [vmem:[%s7 + $0x2c] sm:$0xf]
    %v496 = vld [vmem:[%s7 + $0x30] sm:$0xf]
    %v497 = vld [vmem:[%s7 + $0x34] sm:$0xf]
    %v498 = vld [vmem:[%s7 + $0x38] sm:$0xf]
    %v499 = vld [vmem:[%s7 + $0x3c] sm:$0xf]
    %v500 = vld [vmem:[%s8] sm:$0x1]
    %v502 = vlaneseq
    %v503 = vshrl.u32 %v502, 7
    %v504 = vsub.s32 0, %v503
    %v505 = vrot.slane %v500, %v504
    %v523 = vunpack.c.l.b16 %v484
    %v524 = vunpack.c.l.b16 %v485
    %v525 = vunpack.c.l.b16 %v486
    %v526 = vunpack.c.l.b16 %v487
    %v527 = vunpack.c.l.b16 %v488
    %v528 = vunpack.c.l.b16 %v489
    %v529 = vunpack.c.l.b16 %v490
    %v530 = vunpack.c.l.b16 %v491
    %v531 = vunpack.c.l.b16 %v492
    %v532 = vunpack.c.l.b16 %v493
    %v533 = vunpack.c.l.b16 %v494
    %v534 = vunpack.c.l.b16 %v495
    %v535 = vunpack.c.l.b16 %v496
    %v536 = vunpack.c.l.b16 %v497
    %v537 = vunpack.c.l.b16 %v498
    %v538 = vunpack.c.l.b16 %v499
    %v539 = vpack.c.b16 %v524, %v523
    %v540 = vpack.c.b16 %v526, %v525
    %v541 = vpack.c.b16 %v528, %v527
    %v542 = vpack.c.b16 %v530, %v529
    %v543 = vpack.c.b16 %v532, %v531
    %v544 = vpack.c.b16 %v534, %v533
    %v545 = vpack.c.b16 %v536, %v535
    %v546 = vpack.c.b16 %v538, %v537
    %555 = vmatprep.subr.bf16.mxu0 0
    %556 = vmatpush1.bf16.msra.mxu0 %v546
    %557 = vmatprep.subr.bf16.mxu0 0
    %558 = vmatpush1.bf16.msra.mxu0 %v545
    %559 = vmatprep.subr.bf16.mxu0 0
    %560 = vmatpush1.bf16.msra.mxu0 %v544
    %561 = vmatprep.subr.bf16.mxu0 0
    %562 = vmatpush1.bf16.msra.mxu0 %v543
    %563 = vmatprep.subr.bf16.mxu0 0
    %564 = vmatpush1.bf16.msra.mxu0 %v542
    %565 = vmatprep.subr.bf16.mxu0 0
    %566 = vmatpush1.bf16.msra.mxu0 %v541
    %567 = vmatprep.subr.bf16.mxu0 0
    %568 = vmatpush1.bf16.msra.mxu0 %v540
    %569 = vmatprep.subr.bf16.mxu0 0
    %570 = vmatpush1.bf16.msra.mxu0 %v539
    %571 = vmatprep.subr.bf16.mxu0 0
    %572 = vmatpush2.bf16.msra.mxu0 0
    %573 = vmatprep.subr.bf16.mxu0 0
    %574 = vmatpush2.bf16.msra.mxu0 0
    %575 = vmatprep.subr.bf16.mxu0 0
    %576 = vmatpush2.bf16.msra.mxu0 0
    %577 = vmatprep.subr.bf16.mxu0 0
    %578 = vmatpush2.bf16.msra.mxu0 0
    %579 = vmatprep.subr.bf16.mxu0 0
    %580 = vmatpush2.bf16.msra.mxu0 0
    %581 = vmatprep.subr.bf16.mxu0 0
    %582 = vmatpush2.bf16.msra.mxu0 0
    %583 = vmatprep.subr.bf16.mxu0 0
    %584 = vmatpush2.bf16.msra.mxu0 0
    %585 = vmatprep.subr.bf16.mxu0 0
    %586 = vmatpush2.bf16.msra.mxu0 0
    %587 = vmatprep.mubr.bf16.mxu0 0
    %588 = vmatmul.mubr.bf16.gmra.mxu0 %v483
    %v589 = vpop.f32.mrf.mxu0
    %v590 = vadd.f32 %v505, %v589
    %v591 = vpop.f32.mrf.mxu0
    %v592 = vpop.f32.mrf.mxu0
    %v593 = vadd.f32 %v505, %v592
    %v594 = vpop.f32.mrf.mxu0
    %595 = vdwg.mxu0
    %v596 = vmax.f32 %v590, 0.0
    %v597 = vmax.f32 %v593, 0.0
    %v598 = vld [vmem:[%s9] sm:$0x1]
    %v599 = vpack.c.bf16 %v597, %v596
    %v600 = vstv %s69
    %vm601 = vcmask 523264
    %v603 = vsel %vm601, %v598, 0
    %v606 = vsel %vm601, %v599, 0
    %608 = vmatprep.subr.bf16.mxu0 0
    %609 = vmatpush1.bf16.xpose.msra.mxu0 0
    %610 = vmatprep.subr.bf16.mxu0 0
    %611 = vmatpush1.bf16.xpose.msra.mxu0 0
    %612 = vmatprep.subr.bf16.mxu0 0
    %613 = vmatpush1.bf16.xpose.msra.mxu0 0
    %614 = vmatprep.subr.bf16.mxu0 0
    %615 = vmatpush1.bf16.xpose.msra.mxu0 0
    %616 = vmatprep.subr.bf16.mxu0 0
    %617 = vmatpush1.bf16.xpose.msra.mxu0 0
    %618 = vmatprep.subr.bf16.mxu0 0
    %619 = vmatpush1.bf16.xpose.msra.mxu0 0
    %620 = vmatprep.subr.bf16.mxu0 0
    %621 = vmatpush1.bf16.xpose.msra.mxu0 0
    %622 = vmatprep.subr.bf16.mxu0 0
    %623 = vmatpush1.bf16.xpose.msra.mxu0 %v606
    %624 = vmatprep.subr.bf16.mxu0 0
    %625 = vmatpush2.bf16.xpose.msra.mxu0 0
    %626 = vmatprep.subr.bf16.mxu0 0
    %627 = vmatpush2.bf16.xpose.msra.mxu0 0
    %628 = vmatprep.subr.bf16.mxu0 0
    %629 = vmatpush2.bf16.xpose.msra.mxu0 0
    %630 = vmatprep.subr.bf16.mxu0 0
    %631 = vmatpush2.bf16.xpose.msra.mxu0 0
    %632 = vmatprep.subr.bf16.mxu0 0
    %633 = vmatpush2.bf16.xpose.msra.mxu0 0
    %634 = vmatprep.subr.bf16.mxu0 0
    %635 = vmatpush2.bf16.xpose.msra.mxu0 0
    %636 = vmatprep.subr.bf16.mxu0 0
    %637 = vmatpush2.bf16.xpose.msra.mxu0 0
    %638 = vmatprep.subr.bf16.mxu0 0
    %639 = vmatpush2.bf16.xpose.msra.mxu0 0
    %640 = vmatprep.mubr.bf16.mxu0 0
    %641 = vmatmul.mubr.bf16.gmra.mxu0 %v603
    %v642 = vpop.f32.mrf.mxu0
    %v643 = vadd.f32 %v600, %v642
    %v644 = vpop.f32.mrf.mxu0
    %v645 = vpop.f32.mrf.mxu0
    %v646 = vpop.f32.mrf.mxu0
    %647 = vdwg.mxu0
    %vm648 = vcmask 122880
    %649 = vst.msk [vmem:[#allocation8] sm:$0x1] %vm648, %v643
    // Predicated region
    $region54: #{tpu_custom_call.1} parent=1 // pred_check
      _
    $region55: #{tpu_custom_call.1} parent=1 // pred_check_branch
      %651 = sbr.rel (0) target = $region57
    $region56: #{tpu_custom_call.1} parent=1 // pred_region
      %s653 = ssub.s32 16, 16
      %654 = vsyncadd [#allocation5], %s653
      %s656 = sshll.u32 [#allocation8], 4
      %s657 = int_to_ptr.vmem [resolvable:$true] %s656
      %659 = dma.vmem_to_hbm [thread:$0]  %s657, 16, %s11, [#allocation5]
    $region57: #{tpu_custom_call.1} parent=1 // pred_fallthru
      _
    // Predicated region
    $region58: #{tpu_custom_call.1} parent=1 // pred_check
      _
    $region59: #{tpu_custom_call.1} parent=1 // pred_check_branch
      %661 = sbr.rel (0) target = $region61
    $region60: #{tpu_custom_call.1} parent=1 // pred_region
      %662 = dma.done [#allocation5], 16
    $region61: #{tpu_custom_call.1} parent=1 // pred_fallthru
      _
    %663 = vsyncpa [#allocation4], 1
    %664 = vsyncpa [#allocation7], 1
    %665 = vsyncpa [#allocation5], 1

</llo_original>
